<compile_context>
chip_gen: v5e
topology: v5e:2x2
jax: 0.10.0
libtpu: 0.0.40
codegen_flags: <defaults>
</compile_context>

<pallas_src>
import functools

import jax
import jax.numpy as jnp
from jax.experimental import pallas as pl
from jax.experimental.pallas import tpu as pltpu

_LANES = 128
_SUB_ROWS = 64  # rows per in-kernel sub-chunk: 64x128 f32 = 8 vregs per value


def _round_up(x, m):
    return ((x + m - 1) // m) * m


def _embedding_kernel(x_ref, o_ref, *, freq_bands, use_recurrence, resync_every):
    """Channel-major positional embedding for one lane-dense row tile.

    x_ref: (tb, 128) tile of the feature-major flattened input.
    o_ref: (C, tb, 128) with C = 2*N_freqs + 1:
        channel 0        -> x
        channel 2k + 1   -> sin(freq_k * x)
        channel 2k + 2   -> cos(freq_k * x)
    """
    tb = x_ref.shape[0]
    # Sub-chunk the row tile so only x, s, c (8 vregs each at SUB=64) are live,
    # avoiding vreg spills at large tb (perf-review item 8).
    for start in range(0, tb, _SUB_ROWS):
        size = min(_SUB_ROWS, tb - start)
        x = x_ref[pl.ds(start, size), :].astype(jnp.float32)
        o_ref[0, pl.ds(start, size), :] = x.astype(o_ref.dtype)
        s = c = None
        for k, freq in enumerate(freq_bands):
            if use_recurrence and (k % resync_every) != 0:
                # logscale: freq_k = 2 * freq_{k-1} -> double-angle (VPU only).
                s, c = 2.0 * s * c, c * c - s * s
            else:
                phase = x if freq == 1.0 else freq * x
                s = jnp.sin(phase)
                c = jnp.cos(phase)
            o_ref[2 * k + 1, pl.ds(start, size), :] = s.astype(o_ref.dtype)
            o_ref[2 * k + 2, pl.ds(start, size), :] = c.astype(o_ref.dtype)


def make_embedding(N_freqs, logscale=True, *, tile_rows=512, resync_every=6,
                   interleave=True, out_dtype=None):
    """Returns embedding(x: (B, f)) -> (B, f*(2*N_freqs + 1)) matching the PyTorch module.

    tile_rows:    rows of the lane-dense (rows, 128) view per grid step (512 keeps
                  the double-buffered blocks ~11.5 MiB -> fits every generation's
                  scoped-VMEM default).
    resync_every: evaluate sin/cos directly every this many octaves; doubled via
                  the recurrence in between (accuracy vs. transcendental count).
    interleave:   if False, skip the final relayout and return the channel-major
                  (C*f, B) slab (consumers can permute their first-layer weights).
    out_dtype:    optional narrower output dtype (e.g. jnp.bfloat16) -- compute
                  stays f32, only the stores/writeback shrink.
    """
    if logscale:
        freq_bands = tuple(float(2.0 ** k) for k in range(N_freqs))
    else:
        freq_bands = tuple(float(v) for v in
                           jnp.linspace(1.0, 2.0 ** (N_freqs - 1), N_freqs))
    C = 2 * N_freqs + 1
    use_recurrence = bool(logscale)
    n_direct = sum(1 for k in range(N_freqs)
                   if (not use_recurrence) or (k % resync_every == 0))

    kernel = functools.partial(_embedding_kernel, freq_bands=freq_bands,
                               use_recurrence=use_recurrence,
                               resync_every=resync_every)

    def embedding(x):
        B, f = x.shape
        o_dtype = x.dtype if out_dtype is None else out_dtype
        total = B * f

        # Feature-major flatten (flat index = j*B + b) -> lane-dense (M, 128) view.
        flat = x.T.reshape(-1)
        rows = pl.cdiv(total, _LANES)
        n_tiles = pl.cdiv(rows, tile_rows)
        tb = _round_up(pl.cdiv(rows, n_tiles), 8)   # balanced, 8-sublane aligned
        M = n_tiles * tb
        pad = M * _LANES - total
        if pad:
            flat = jnp.pad(flat, (0, pad))
        x2d = flat.reshape(M, _LANES)

        elems = M * _LANES
        cost = pl.CostEstimate(
            flops=6 * N_freqs * elems,
            transcendentals=2 * n_direct * elems,
            bytes_accessed=(jnp.dtype(x.dtype).itemsize
                            + C * jnp.dtype(o_dtype).itemsize) * elems,
        )

        slab = pl.pallas_call(
            kernel,
            out_shape=jax.ShapeDtypeStruct((C, M, _LANES), o_dtype),
            grid=(n_tiles,),
            in_specs=[pl.BlockSpec((tb, _LANES), lambda i: (i, 0))],
            out_specs=pl.BlockSpec((C, tb, _LANES), lambda i: (0, i, 0)),
            compiler_params=pltpu.CompilerParams(
                dimension_semantics=("parallel",)),
            cost_estimate=cost,
        )(x2d)

        # (C, M*128) -> drop padding -> (C*f, B); row c*f + j holds channel c of
        # feature j for every batch element (lane axis = batch, so this is free).
        out_cm = slab.reshape(C, M * _LANES)[:, :total].reshape(C * f, B)
        if not interleave:
            # TODO(synk): downstream NeRF MLPs can consume this channel-major layout
            # directly by permuting their first dense layer's weight rows, removing
            # the transpose below entirely.
            return out_cm
        # Single 2-D transpose (C*f, B) -> (B, C*f): dense reads, 63-wide-minor
        # writes (vs. the previous 3-wide-minor (C,B,f)->(B,C,f) permute).
        return out_cm.T

    return embedding


def embedding_ref(x, N_freqs, logscale=True):
    """Pure-JAX reference matching the PyTorch forward."""
    if logscale:
        freq_bands = 2.0 ** jnp.linspace(0.0, N_freqs - 1, N_freqs)
    else:
        freq_bands = jnp.linspace(1.0, 2.0 ** (N_freqs - 1), N_freqs)
    out = [x]
    for freq in freq_bands:
        out.append(jnp.sin(freq * x))
        out.append(jnp.cos(freq * x))
    return jnp.concatenate(out, axis=-1)


if __name__ == "__main__":
    N_freqs = 10          # NeRF xyz embedding
    B, f = 64, 3          # small batch of (normalized) 3-D coordinates

    key = jax.random.PRNGKey(0)
    x = jax.random.uniform(key, (B, f), dtype=jnp.float32, minval=-1.0, maxval=1.0)

    embed = jax.jit(make_embedding(N_freqs, logscale=True))
    out = jax.block_until_ready(embed(x))
    ref = embedding_ref(x, N_freqs, logscale=True)
    assert out.shape == (B, 2 * f * N_freqs + f), out.shape
    # Double-angle recurrence (resynced every 6 octaves) keeps absolute error
    # well below 1e-4 in fp32 for N_freqs=10.
    assert jnp.allclose(out, ref, atol=5e-4, rtol=0.0), \
        float(jnp.max(jnp.abs(out - ref)))

    # Non-divisible / padded multi-row path.
    x2 = jax.random.uniform(jax.random.PRNGKey(1), (1000, f), dtype=jnp.float32,
                            minval=-1.0, maxval=1.0)
    out2 = jax.block_until_ready(embed(x2))
    ref2 = embedding_ref(x2, N_freqs, logscale=True)
    assert out2.shape == (1000, 2 * f * N_freqs + f), out2.shape
    assert jnp.allclose(out2, ref2, atol=5e-4, rtol=0.0), \
        float(jnp.max(jnp.abs(out2 - ref2)))

    print("KERNEL_OK")
</pallas_src>

<mosaic_0001>
module attributes {stable_mosaic.version = 11 : i64} {
  func.func @_embedding_kernel(%arg0: i32, %arg1: memref<8x128xf32, #tpu.memory_space<vmem>>, %arg2: memref<21x8x128xf32, #tpu.memory_space<vmem>>) attributes {dimension_semantics = [#tpu.dimension_semantics<parallel>], iteration_bounds = array<i64: 1>, scalar_prefetch = 0 : i64, scratch_operands = 0 : i64, tpu.core_type = #tpu.core_type<tc>, window_params = [{transform_indices = @transform_0, window_bounds = array<i64: 8, 128>}, {transform_indices = @transform_1, window_bounds = array<i64: 21, 8, 128>}]} {
    %c0 = arith.constant 0 : index
    %c0_0 = arith.constant 0 : index
    %0 = vector.load %arg1[%c0, %c0_0] : memref<8x128xf32, #tpu.memory_space<vmem>>, vector<8x128xf32>
    %c0_1 = arith.constant 0 : index
    %c0_2 = arith.constant 0 : index
    %c0_3 = arith.constant 0 : index
    %1 = vector.load %arg2[%c0_1, %c0_2, %c0_3] : memref<21x8x128xf32, #tpu.memory_space<vmem>>, vector<1x8x128xf32>
    %2 = vector.shape_cast %1 : vector<1x8x128xf32> to vector<8x128xf32>
    %3 = vector.shape_cast %0 : vector<8x128xf32> to vector<1x8x128xf32>
    tpu.vector_store %arg2[%c0_1, %c0_2, %c0_3], %3 {strides = array<i32>} : memref<21x8x128xf32, #tpu.memory_space<vmem>>, vector<1x8x128xf32>,
    %4 = math.sin %0 : vector<8x128xf32>
    %5 = math.cos %0 : vector<8x128xf32>
    %c1 = arith.constant 1 : index
    %c0_4 = arith.constant 0 : index
    %c0_5 = arith.constant 0 : index
    %6 = vector.load %arg2[%c1, %c0_4, %c0_5] : memref<21x8x128xf32, #tpu.memory_space<vmem>>, vector<1x8x128xf32>
    %7 = vector.shape_cast %6 : vector<1x8x128xf32> to vector<8x128xf32>
    %8 = vector.shape_cast %4 : vector<8x128xf32> to vector<1x8x128xf32>
    tpu.vector_store %arg2[%c1, %c0_4, %c0_5], %8 {strides = array<i32>} : memref<21x8x128xf32, #tpu.memory_space<vmem>>, vector<1x8x128xf32>,
    %c2 = arith.constant 2 : index
    %c0_6 = arith.constant 0 : index
    %c0_7 = arith.constant 0 : index
    %9 = vector.load %arg2[%c2, %c0_6, %c0_7] : memref<21x8x128xf32, #tpu.memory_space<vmem>>, vector<1x8x128xf32>
    %10 = vector.shape_cast %9 : vector<1x8x128xf32> to vector<8x128xf32>
    %11 = vector.shape_cast %5 : vector<8x128xf32> to vector<1x8x128xf32>
    tpu.vector_store %arg2[%c2, %c0_6, %c0_7], %11 {strides = array<i32>} : memref<21x8x128xf32, #tpu.memory_space<vmem>>, vector<1x8x128xf32>,
    %cst = arith.constant 2.000000e+00 : f32
    %12 = vector.broadcast %cst : f32 to vector<8x128xf32>
    %13 = arith.mulf %12, %4 : vector<8x128xf32>
    %14 = arith.mulf %13, %5 : vector<8x128xf32>
    %15 = arith.mulf %5, %5 : vector<8x128xf32>
    %16 = arith.mulf %4, %4 : vector<8x128xf32>
    %17 = arith.subf %15, %16 : vector<8x128xf32>
    %c3 = arith.constant 3 : index
    %c0_8 = arith.constant 0 : index
    %c0_9 = arith.constant 0 : index
    %18 = vector.load %arg2[%c3, %c0_8, %c0_9] : memref<21x8x128xf32, #tpu.memory_space<vmem>>, vector<1x8x128xf32>
    %19 = vector.shape_cast %18 : vector<1x8x128xf32> to vector<8x128xf32>
    %20 = vector.shape_cast %14 : vector<8x128xf32> to vector<1x8x128xf32>
    tpu.vector_store %arg2[%c3, %c0_8, %c0_9], %20 {strides = array<i32>} : memref<21x8x128xf32, #tpu.memory_space<vmem>>, vector<1x8x128xf32>,
    %c4 = arith.constant 4 : index
    %c0_10 = arith.constant 0 : index
    %c0_11 = arith.constant 0 : index
    %21 = vector.load %arg2[%c4, %c0_10, %c0_11] : memref<21x8x128xf32, #tpu.memory_space<vmem>>, vector<1x8x128xf32>
    %22 = vector.shape_cast %21 : vector<1x8x128xf32> to vector<8x128xf32>
    %23 = vector.shape_cast %17 : vector<8x128xf32> to vector<1x8x128xf32>
    tpu.vector_store %arg2[%c4, %c0_10, %c0_11], %23 {strides = array<i32>} : memref<21x8x128xf32, #tpu.memory_space<vmem>>, vector<1x8x128xf32>,
    %cst_12 = arith.constant 2.000000e+00 : f32
    %24 = vector.broadcast %cst_12 : f32 to vector<8x128xf32>
    %25 = arith.mulf %24, %14 : vector<8x128xf32>
    %26 = arith.mulf %25, %17 : vector<8x128xf32>
    %27 = arith.mulf %17, %17 : vector<8x128xf32>
    %28 = arith.mulf %14, %14 : vector<8x128xf32>
    %29 = arith.subf %27, %28 : vector<8x128xf32>
    %c5 = arith.constant 5 : index
    %c0_13 = arith.constant 0 : index
    %c0_14 = arith.constant 0 : index
    %30 = vector.load %arg2[%c5, %c0_13, %c0_14] : memref<21x8x128xf32, #tpu.memory_space<vmem>>, vector<1x8x128xf32>
    %31 = vector.shape_cast %30 : vector<1x8x128xf32> to vector<8x128xf32>
    %32 = vector.shape_cast %26 : vector<8x128xf32> to vector<1x8x128xf32>
    tpu.vector_store %arg2[%c5, %c0_13, %c0_14], %32 {strides = array<i32>} : memref<21x8x128xf32, #tpu.memory_space<vmem>>, vector<1x8x128xf32>,
    %c6 = arith.constant 6 : index
    %c0_15 = arith.constant 0 : index
    %c0_16 = arith.constant 0 : index
    %33 = vector.load %arg2[%c6, %c0_15, %c0_16] : memref<21x8x128xf32, #tpu.memory_space<vmem>>, vector<1x8x128xf32>
    %34 = vector.shape_cast %33 : vector<1x8x128xf32> to vector<8x128xf32>
    %35 = vector.shape_cast %29 : vector<8x128xf32> to vector<1x8x128xf32>
    tpu.vector_store %arg2[%c6, %c0_15, %c0_16], %35 {strides = array<i32>} : memref<21x8x128xf32, #tpu.memory_space<vmem>>, vector<1x8x128xf32>,
    %cst_17 = arith.constant 2.000000e+00 : f32
    %36 = vector.broadcast %cst_17 : f32 to vector<8x128xf32>
    %37 = arith.mulf %36, %26 : vector<8x128xf32>
    %38 = arith.mulf %37, %29 : vector<8x128xf32>
    %39 = arith.mulf %29, %29 : vector<8x128xf32>
    %40 = arith.mulf %26, %26 : vector<8x128xf32>
    %41 = arith.subf %39, %40 : vector<8x128xf32>
    %c7 = arith.constant 7 : index
    %c0_18 = arith.constant 0 : index
    %c0_19 = arith.constant 0 : index
    %42 = vector.load %arg2[%c7, %c0_18, %c0_19] : memref<21x8x128xf32, #tpu.memory_space<vmem>>, vector<1x8x128xf32>
    %43 = vector.shape_cast %42 : vector<1x8x128xf32> to vector<8x128xf32>
    %44 = vector.shape_cast %38 : vector<8x128xf32> to vector<1x8x128xf32>
    tpu.vector_store %arg2[%c7, %c0_18, %c0_19], %44 {strides = array<i32>} : memref<21x8x128xf32, #tpu.memory_space<vmem>>, vector<1x8x128xf32>,
    %c8 = arith.constant 8 : index
    %c0_20 = arith.constant 0 : index
    %c0_21 = arith.constant 0 : index
    %45 = vector.load %arg2[%c8, %c0_20, %c0_21] : memref<21x8x128xf32, #tpu.memory_space<vmem>>, vector<1x8x128xf32>
    %46 = vector.shape_cast %45 : vector<1x8x128xf32> to vector<8x128xf32>
    %47 = vector.shape_cast %41 : vector<8x128xf32> to vector<1x8x128xf32>
    tpu.vector_store %arg2[%c8, %c0_20, %c0_21], %47 {strides = array<i32>} : memref<21x8x128xf32, #tpu.memory_space<vmem>>, vector<1x8x128xf32>,
    %cst_22 = arith.constant 2.000000e+00 : f32
    %48 = vector.broadcast %cst_22 : f32 to vector<8x128xf32>
    %49 = arith.mulf %48, %38 : vector<8x128xf32>
    %50 = arith.mulf %49, %41 : vector<8x128xf32>
    %51 = arith.mulf %41, %41 : vector<8x128xf32>
    %52 = arith.mulf %38, %38 : vector<8x128xf32>
    %53 = arith.subf %51, %52 : vector<8x128xf32>
    %c9 = arith.constant 9 : index
    %c0_23 = arith.constant 0 : index
    %c0_24 = arith.constant 0 : index
    %54 = vector.load %arg2[%c9, %c0_23, %c0_24] : memref<21x8x128xf32, #tpu.memory_space<vmem>>, vector<1x8x128xf32>
    %55 = vector.shape_cast %54 : vector<1x8x128xf32> to vector<8x128xf32>
    %56 = vector.shape_cast %50 : vector<8x128xf32> to vector<1x8x128xf32>
    tpu.vector_store %arg2[%c9, %c0_23, %c0_24], %56 {strides = array<i32>} : memref<21x8x128xf32, #tpu.memory_space<vmem>>, vector<1x8x128xf32>,
    %c10 = arith.constant 10 : index
    %c0_25 = arith.constant 0 : index
    %c0_26 = arith.constant 0 : index
    %57 = vector.load %arg2[%c10, %c0_25, %c0_26] : memref<21x8x128xf32, #tpu.memory_space<vmem>>, vector<1x8x128xf32>
    %58 = vector.shape_cast %57 : vector<1x8x128xf32> to vector<8x128xf32>
    %59 = vector.shape_cast %53 : vector<8x128xf32> to vector<1x8x128xf32>
    tpu.vector_store %arg2[%c10, %c0_25, %c0_26], %59 {strides = array<i32>} : memref<21x8x128xf32, #tpu.memory_space<vmem>>, vector<1x8x128xf32>,
    %cst_27 = arith.constant 2.000000e+00 : f32
    %60 = vector.broadcast %cst_27 : f32 to vector<8x128xf32>
    %61 = arith.mulf %60, %50 : vector<8x128xf32>
    %62 = arith.mulf %61, %53 : vector<8x128xf32>
    %63 = arith.mulf %53, %53 : vector<8x128xf32>
    %64 = arith.mulf %50, %50 : vector<8x128xf32>
    %65 = arith.subf %63, %64 : vector<8x128xf32>
    %c11 = arith.constant 11 : index
    %c0_28 = arith.constant 0 : index
    %c0_29 = arith.constant 0 : index
    %66 = vector.load %arg2[%c11, %c0_28, %c0_29] : memref<21x8x128xf32, #tpu.memory_space<vmem>>, vector<1x8x128xf32>
    %67 = vector.shape_cast %66 : vector<1x8x128xf32> to vector<8x128xf32>
    %68 = vector.shape_cast %62 : vector<8x128xf32> to vector<1x8x128xf32>
    tpu.vector_store %arg2[%c11, %c0_28, %c0_29], %68 {strides = array<i32>} : memref<21x8x128xf32, #tpu.memory_space<vmem>>, vector<1x8x128xf32>,
    %c12 = arith.constant 12 : index
    %c0_30 = arith.constant 0 : index
    %c0_31 = arith.constant 0 : index
    %69 = vector.load %arg2[%c12, %c0_30, %c0_31] : memref<21x8x128xf32, #tpu.memory_space<vmem>>, vector<1x8x128xf32>
    %70 = vector.shape_cast %69 : vector<1x8x128xf32> to vector<8x128xf32>
    %71 = vector.shape_cast %65 : vector<8x128xf32> to vector<1x8x128xf32>
    tpu.vector_store %arg2[%c12, %c0_30, %c0_31], %71 {strides = array<i32>} : memref<21x8x128xf32, #tpu.memory_space<vmem>>, vector<1x8x128xf32>,
    %cst_32 = arith.constant 6.400000e+01 : f32
    %72 = vector.broadcast %cst_32 : f32 to vector<8x128xf32>
    %73 = arith.mulf %72, %0 : vector<8x128xf32>
    %74 = math.sin %73 : vector<8x128xf32>
    %75 = math.cos %73 : vector<8x128xf32>
    %c13 = arith.constant 13 : index
    %c0_33 = arith.constant 0 : index
    %c0_34 = arith.constant 0 : index
    %76 = vector.load %arg2[%c13, %c0_33, %c0_34] : memref<21x8x128xf32, #tpu.memory_space<vmem>>, vector<1x8x128xf32>
    %77 = vector.shape_cast %76 : vector<1x8x128xf32> to vector<8x128xf32>
    %78 = vector.shape_cast %74 : vector<8x128xf32> to vector<1x8x128xf32>
    tpu.vector_store %arg2[%c13, %c0_33, %c0_34], %78 {strides = array<i32>} : memref<21x8x128xf32, #tpu.memory_space<vmem>>, vector<1x8x128xf32>,
    %c14 = arith.constant 14 : index
    %c0_35 = arith.constant 0 : index
    %c0_36 = arith.constant 0 : index
    %79 = vector.load %arg2[%c14, %c0_35, %c0_36] : memref<21x8x128xf32, #tpu.memory_space<vmem>>, vector<1x8x128xf32>
    %80 = vector.shape_cast %79 : vector<1x8x128xf32> to vector<8x128xf32>
    %81 = vector.shape_cast %75 : vector<8x128xf32> to vector<1x8x128xf32>
    tpu.vector_store %arg2[%c14, %c0_35, %c0_36], %81 {strides = array<i32>} : memref<21x8x128xf32, #tpu.memory_space<vmem>>, vector<1x8x128xf32>,
    %cst_37 = arith.constant 2.000000e+00 : f32
    %82 = vector.broadcast %cst_37 : f32 to vector<8x128xf32>
    %83 = arith.mulf %82, %74 : vector<8x128xf32>
    %84 = arith.mulf %83, %75 : vector<8x128xf32>
    %85 = arith.mulf %75, %75 : vector<8x128xf32>
    %86 = arith.mulf %74, %74 : vector<8x128xf32>
    %87 = arith.subf %85, %86 : vector<8x128xf32>
    %c15 = arith.constant 15 : index
    %c0_38 = arith.constant 0 : index
    %c0_39 = arith.constant 0 : index
    %88 = vector.load %arg2[%c15, %c0_38, %c0_39] : memref<21x8x128xf32, #tpu.memory_space<vmem>>, vector<1x8x128xf32>
    %89 = vector.shape_cast %88 : vector<1x8x128xf32> to vector<8x128xf32>
    %90 = vector.shape_cast %84 : vector<8x128xf32> to vector<1x8x128xf32>
    tpu.vector_store %arg2[%c15, %c0_38, %c0_39], %90 {strides = array<i32>} : memref<21x8x128xf32, #tpu.memory_space<vmem>>, vector<1x8x128xf32>,
    %c16 = arith.constant 16 : index
    %c0_40 = arith.constant 0 : index
    %c0_41 = arith.constant 0 : index
    %91 = vector.load %arg2[%c16, %c0_40, %c0_41] : memref<21x8x128xf32, #tpu.memory_space<vmem>>, vector<1x8x128xf32>
    %92 = vector.shape_cast %91 : vector<1x8x128xf32> to vector<8x128xf32>
    %93 = vector.shape_cast %87 : vector<8x128xf32> to vector<1x8x128xf32>
    tpu.vector_store %arg2[%c16, %c0_40, %c0_41], %93 {strides = array<i32>} : memref<21x8x128xf32, #tpu.memory_space<vmem>>, vector<1x8x128xf32>,
    %cst_42 = arith.constant 2.000000e+00 : f32
    %94 = vector.broadcast %cst_42 : f32 to vector<8x128xf32>
    %95 = arith.mulf %94, %84 : vector<8x128xf32>
    %96 = arith.mulf %95, %87 : vector<8x128xf32>
    %97 = arith.mulf %87, %87 : vector<8x128xf32>
    %98 = arith.mulf %84, %84 : vector<8x128xf32>
    %99 = arith.subf %97, %98 : vector<8x128xf32>
    %c17 = arith.constant 17 : index
    %c0_43 = arith.constant 0 : index
    %c0_44 = arith.constant 0 : index
    %100 = vector.load %arg2[%c17, %c0_43, %c0_44] : memref<21x8x128xf32, #tpu.memory_space<vmem>>, vector<1x8x128xf32>
    %101 = vector.shape_cast %100 : vector<1x8x128xf32> to vector<8x128xf32>
    %102 = vector.shape_cast %96 : vector<8x128xf32> to vector<1x8x128xf32>
    tpu.vector_store %arg2[%c17, %c0_43, %c0_44], %102 {strides = array<i32>} : memref<21x8x128xf32, #tpu.memory_space<vmem>>, vector<1x8x128xf32>,
    %c18 = arith.constant 18 : index
    %c0_45 = arith.constant 0 : index
    %c0_46 = arith.constant 0 : index
    %103 = vector.load %arg2[%c18, %c0_45, %c0_46] : memref<21x8x128xf32, #tpu.memory_space<vmem>>, vector<1x8x128xf32>
    %104 = vector.shape_cast %103 : vector<1x8x128xf32> to vector<8x128xf32>
    %105 = vector.shape_cast %99 : vector<8x128xf32> to vector<1x8x128xf32>
    tpu.vector_store %arg2[%c18, %c0_45, %c0_46], %105 {strides = array<i32>} : memref<21x8x128xf32, #tpu.memory_space<vmem>>, vector<1x8x128xf32>,
    %cst_47 = arith.constant 2.000000e+00 : f32
    %106 = vector.broadcast %cst_47 : f32 to vector<8x128xf32>
    %107 = arith.mulf %106, %96 : vector<8x128xf32>
    %108 = arith.mulf %107, %99 : vector<8x128xf32>
    %109 = arith.mulf %99, %99 : vector<8x128xf32>
    %110 = arith.mulf %96, %96 : vector<8x128xf32>
    %111 = arith.subf %109, %110 : vector<8x128xf32>
    %c19 = arith.constant 19 : index
    %c0_48 = arith.constant 0 : index
    %c0_49 = arith.constant 0 : index
    %112 = vector.load %arg2[%c19, %c0_48, %c0_49] : memref<21x8x128xf32, #tpu.memory_space<vmem>>, vector<1x8x128xf32>
    %113 = vector.shape_cast %112 : vector<1x8x128xf32> to vector<8x128xf32>
    %114 = vector.shape_cast %108 : vector<8x128xf32> to vector<1x8x128xf32>
    tpu.vector_store %arg2[%c19, %c0_48, %c0_49], %114 {strides = array<i32>} : memref<21x8x128xf32, #tpu.memory_space<vmem>>, vector<1x8x128xf32>,
    %c20 = arith.constant 20 : index
    %c0_50 = arith.constant 0 : index
    %c0_51 = arith.constant 0 : index
    %115 = vector.load %arg2[%c20, %c0_50, %c0_51] : memref<21x8x128xf32, #tpu.memory_space<vmem>>, vector<1x8x128xf32>
    %116 = vector.shape_cast %115 : vector<1x8x128xf32> to vector<8x128xf32>
    %117 = vector.shape_cast %111 : vector<8x128xf32> to vector<1x8x128xf32>
    tpu.vector_store %arg2[%c20, %c0_50, %c0_51], %117 {strides = array<i32>} : memref<21x8x128xf32, #tpu.memory_space<vmem>>, vector<1x8x128xf32>,
    return
  }
  func.func @transform_0(%arg0: i32) -> (i32, i32) {
    %c0_i32 = arith.constant 0 : i32
    %c0_i32_0 = arith.constant 0 : i32
    return %arg0, %c0_i32 : i32, i32
  }
  func.func @transform_1(%arg0: i32) -> (i32, i32, i32) {
    %c0_i32 = arith.constant 0 : i32
    %c0_i32_0 = arith.constant 0 : i32
    %c0_i32_1 = arith.constant 0 : i32
    return %c0_i32, %arg0, %c0_i32_0 : i32, i32, i32
  }
}

</mosaic_0001>

<llo_original>
// kernel: embedding.1
$region0: #{embedding.1}
  #allocation0 [shape = 'u32[]', space=smem, size = 0x4, offset = 0x4, fixed_abs, tag = 'smem constant byte address 0x4 - core index']
  #allocation1 [shape = 'u32[72,128]{1,0:T(1,128)}', space=vmem, size = 0x9000, scoped, tag = 'internal scratch']
  %s0 = inlined_call_operand.vmem [shape: f32[8,128], index: 0, kind: input, shape index: {}]
  %s1 = inlined_call_operand.vmem [shape: f32[21,8,128], index: 1, kind: output, shape index: {}]
  %s2 = sld [smem:[#allocation0]]
  $region14: #{embedding.1} parent=0
    _
  %s4 = ssub.s32 1, %s2
  %s5 = scalar_select 0, %s4, %s2
  // Predicated region
  $region2: #{embedding.1} parent=0 // pred_check
    _
  $region3: #{embedding.1} parent=0 // pred_check_branch
    %7 = sbr.rel (0) target = $region5
  $region4: #{embedding.1} parent=0 // pred_region
    _
  $region5: #{embedding.1} parent=0 // pred_fallthru
    _
  %v8 = vld [vmem:[%s0] sm:$0xff]
  %9 = vst [vmem:[%s1] sm:$0xff] %v8
  %v10 = vand.u32 2147483647, %v8
  %vm11 = vcmp.le.f32.partialorder %v10, 0.7853982
  %vm12 = vcmp.lt.s32.totalorder %v8, 0
  %v13 = vand.u32 %v8, 2139095040
  %v14 = vshrl.u32 %v13, 23
  %v15 = vsub.s32 %v14, 127
  %v16 = vand.u32 2147483647, %v8
  %v17 = vand.u32 %v16, 8388607
  %v18 = vor.u32 %v17, 8388608
  %v19 = vsub.s32 0, %v18
  %v20 = vadd.s32 %v15, 1
  %vm21 = vcmp.gt.s32.totalorder %v20, 0
  %v22 = vsel %vm21, %v20, 0
  %v23 = vshrl.u32 %v22, 5
  %v24 = vand.u32 %v22, 31
  %v25 = vsub.s32 32, %v24
  %v26 = vshrl.u32 683565275, %v25
  %v27 = vshll.u32 683565275, %v24
  %v28 = vshrl.u32 2475754826, %v25
  %v29 = vor.u32 %v27, %v28
  %v30 = vshll.u32 2475754826, %v24
  %v31 = vshrl.u32 2131351028, %v25
  %v32 = vor.u32 %v30, %v31
  %v33 = vshll.u32 2131351028, %v24
  %v34 = vshrl.u32 2102212464, %v25
  %v35 = vor.u32 %v33, %v34
  %v36 = vshll.u32 2102212464, %v24
  %v37 = vshrl.u32 920167782, %v25
  %v38 = vor.u32 %v36, %v37
  %v39 = vshll.u32 920167782, %v24
  %v40 = vshrl.u32 1326507024, %v25
  %v41 = vor.u32 %v39, %v40
  %vm42 = vcmp.lt.s32.totalorder %v23, 1
  %vm43 = vcmp.lt.s32.totalorder %v23, 2
  %vm44 = vcmp.lt.s32.totalorder %v23, 3
  %vm45 = vcmp.lt.s32.totalorder %v23, 4
  %v46 = vsel %vm42, %v26, %v29
  %v47 = vsel %vm45, %v35, 2102212464
  %v48 = vsel %vm44, %v32, %v47
  %v49 = vsel %vm43, %v46, %v48
  %v50 = vsel %vm42, %v29, %v32
  %v51 = vsel %vm45, %v38, 920167782
  %v52 = vsel %vm44, %v35, %v51
  %v53 = vsel %vm43, %v50, %v52
  %v54 = vsel %vm42, %v32, %v35
  %v55 = vsel %vm45, %v41, 1326507024
  %v56 = vsel %vm44, %v38, %v55
  %v57 = vsel %vm43, %v54, %v56
  %v58 = vshll.u32 %v18, 8
  %v59 = vand.u32 %v58, 65535
  %v60 = vshrl.u32 %v58, 16
  %v61 = vand.u32 %v57, 65535
  %v62 = vshrl.u32 %v57, 16
  %v63 = vmul.u32 %v59, %v61
  %v64 = vmul.u32 %v59, %v62
  %v65 = vmul.u32 %v60, %v61
  %v66 = vmul.u32 %v60, %v62
  %v67 = vshll.u32 %v64, 16
  %v68 = vshrl.u32 %v64, 16
  %v69 = vshll.u32 %v65, 16
  %v70 = vshrl.u32 %v65, 16
  %vm71 = vc.u32 %v63, %v67
  %v72 = vsel %vm71, 1, 0
  %v73 = vadd.s32 %v63, %v67
  %v74 = vadd.s32 %v66, %v72
  %vm75 = vc.u32 %v73, %v69
  %v76 = vsel %vm75, 1, 0
  %v77 = vadd.s32 %v73, %v69
  %v78 = vadd.s32 %v74, %v76
  %v79 = vadd.s32 %v78, %v68
  %v80 = vadd.s32 %v79, %v70
  %v81 = vand.u32 %v58, 65535
  %v82 = vshrl.u32 %v58, 16
  %v83 = vand.u32 %v53, 65535
  %v84 = vshrl.u32 %v53, 16
  %v85 = vmul.u32 %v81, %v83
  %v86 = vmul.u32 %v81, %v84
  %v87 = vmul.u32 %v82, %v83
  %v88 = vmul.u32 %v82, %v84
  %v89 = vshll.u32 %v86, 16
  %v90 = vshrl.u32 %v86, 16
  %v91 = vshll.u32 %v87, 16
  %v92 = vshrl.u32 %v87, 16
  %vm93 = vc.u32 %v85, %v89
  %v94 = vsel %vm93, 1, 0
  %v95 = vadd.s32 %v85, %v89
  %v96 = vadd.s32 %v88, %v94
  %vm97 = vc.u32 %v95, %v91
  %v98 = vsel %vm97, 1, 0
  %v99 = vadd.s32 %v95, %v91
  %v100 = vadd.s32 %v96, %v98
  %v101 = vadd.s32 %v100, %v90
  %v102 = vadd.s32 %v101, %v92
  %v103 = vmul.u32 %v58, %v49
  %v104 = vadd.s32 %v80, %v99
  %vm105 = vc.u32 %v80, %v99
  %v106 = vadd.s32 %v102, 1
  %v107 = vsel %vm105, %v106, %v102
  %v108 = vadd.s32 %v103, %v107
  %v109 = vadd.s32 %v108, 536870912
  %v110 = vshrl.u32 %v109, 30
  %v111 = vshll.u32 %v110, 30
  %v112 = vsub.s32 %v108, %v111
  %vm113 = vcmp.lt.s32.totalorder %v112, 0
  %v114 = vsub.s32 0, %v112
  %v115 = vsel %vm113, %v114, %v112
  %v116 = vclz %v115
  %v117 = vsub.s32 %v116, 2
  %vm118 = vcmp.gt.s32.totalorder 0, %v117
  %v119 = vsel %vm118, 0, %v117
  %v120 = vsub.s32 32, %v119
  %v121 = vshll.u32 %v112, %v119
  %v122 = vshrl.u32 %v104, %v120
  %v123 = vor.u32 %v121, %v122
  %v124 = vsub.s32 4294967266, %v119
  %v125 = vadd.s32 %v124, 127
  %v126 = vshll.u32 %v125, 23
  %v127 = vor.u32 4788187, %v126
  %v128 = vand.u32 2147483647, %v127
  %v130 = vcvt.s32.f32 %v123
  %v131 = vmul.f32 %v130, %v128
  %v132 = vxor.u32 %v131, 2147483648
  %v133 = vsel %vm12, %v132, %v131
  %v134 = vsub.s32 4, %v110
  %v135 = vsel %vm12, %v134, %v110
  %v136 = vsel %vm11, %v8, %v133
  %v137 = vsel %vm11, 0, %v135
  %v138 = vmul.f32 %v136, %v136
  %v139 = vmul.f32 %v138, -0.001358992
  %v140 = vadd.f32 %v139, 0.041655596
  %v141 = vmul.f32 %v138, %v140
  %v142 = vadd.f32 %v141, -0.4999988
  %v143 = vmul.f32 %v138, %v142
  %v144 = vadd.f32 1.0, %v143
  %v145 = vmul.f32 %v136, %v136
  %v146 = vmul.f32 %v145, -0.00019511016
  %v147 = vadd.f32 %v146, 0.008332121
  %v148 = vmul.f32 %v145, %v147
  %v149 = vadd.f32 %v148, -0.16666654
  %v150 = vmul.f32 %v145, %v149
  %v151 = vadd.f32 %v150, 1.0
  %v152 = vmul.f32 %v151, %v136
  %vm153 = vweird.f32 %v8
  %v154 = vadd.s32 %v137, 3
  %v155 = vand.u32 %v154, 3
  %vm156 = vcmp.lt.s32.totalorder %v155, 2
  %vm157 = vcmp.eq.s32.totalorder %v155, 0
  %v158 = vxor.u32 %v152, 2147483648
  %v159 = vsel %vm157, %v144, %v158
  %vm160 = vcmp.eq.s32.totalorder %v155, 2
  %v161 = vxor.u32 %v144, 2147483648
  %v162 = vsel %vm160, %v161, %v152
  %v163 = vsel %vm156, %v159, %v162
  %v164 = vsel %vm153, nan, %v163
  %v165 = vand.u32 2147483647, %v8
  %vm166 = vcmp.le.f32.partialorder %v165, 0.7853982
  %vm167 = vcmp.lt.s32.totalorder %v8, 0
  %v168 = vand.u32 %v8, 2139095040
  %v169 = vshrl.u32 %v168, 23
  %v170 = vsub.s32 %v169, 127
  %v171 = vand.u32 2147483647, %v8
  %v172 = vand.u32 %v171, 8388607
  %v173 = vor.u32 %v172, 8388608
  %v174 = vsub.s32 0, %v173
  %v175 = vadd.s32 %v170, 1
  %vm176 = vcmp.gt.s32.totalorder %v175, 0
  %v177 = vsel %vm176, %v175, 0
  %v178 = vshrl.u32 %v177, 5
  %v179 = vand.u32 %v177, 31
  %v180 = vsub.s32 32, %v179
  %v181 = vshrl.u32 683565275, %v180
  %v182 = vshll.u32 683565275, %v179
  %v183 = vshrl.u32 2475754826, %v180
  %v184 = vor.u32 %v182, %v183
  %v185 = vshll.u32 2475754826, %v179
  %v186 = vshrl.u32 2131351028, %v180
  %v187 = vor.u32 %v185, %v186
  %v188 = vshll.u32 2131351028, %v179
  %v189 = vshrl.u32 2102212464, %v180
  %v190 = vor.u32 %v188, %v189
  %v191 = vshll.u32 2102212464, %v179
  %v192 = vshrl.u32 920167782, %v180
  %v193 = vor.u32 %v191, %v192
  %v194 = vshll.u32 920167782, %v179
  %v195 = vshrl.u32 1326507024, %v180
  %v196 = vor.u32 %v194, %v195
  %vm197 = vcmp.lt.s32.totalorder %v178, 1
  %vm198 = vcmp.lt.s32.totalorder %v178, 2
  %vm199 = vcmp.lt.s32.totalorder %v178, 3
  %vm200 = vcmp.lt.s32.totalorder %v178, 4
  %v201 = vsel %vm197, %v181, %v184
  %v202 = vsel %vm200, %v190, 2102212464
  %v203 = vsel %vm199, %v187, %v202
  %v204 = vsel %vm198, %v201, %v203
  %v205 = vsel %vm197, %v184, %v187
  %v206 = vsel %vm200, %v193, 920167782
  %v207 = vsel %vm199, %v190, %v206
  %v208 = vsel %vm198, %v205, %v207
  %v209 = vsel %vm197, %v187, %v190
  %v210 = vsel %vm200, %v196, 1326507024
  %v211 = vsel %vm199, %v193, %v210
  %v212 = vsel %vm198, %v209, %v211
  %v213 = vshll.u32 %v173, 8
  %v214 = vand.u32 %v213, 65535
  %v215 = vshrl.u32 %v213, 16
  %v216 = vand.u32 %v212, 65535
  %v217 = vshrl.u32 %v212, 16
  %v218 = vmul.u32 %v214, %v216
  %v219 = vmul.u32 %v214, %v217
  %v220 = vmul.u32 %v215, %v216
  %v221 = vmul.u32 %v215, %v217
  %v222 = vshll.u32 %v219, 16
  %v223 = vshrl.u32 %v219, 16
  %v224 = vshll.u32 %v220, 16
  %v225 = vshrl.u32 %v220, 16
  %vm226 = vc.u32 %v218, %v222
  %v227 = vsel %vm226, 1, 0
  %v228 = vadd.s32 %v218, %v222
  %v229 = vadd.s32 %v221, %v227
  %vm230 = vc.u32 %v228, %v224
  %v231 = vsel %vm230, 1, 0
  %v232 = vadd.s32 %v228, %v224
  %v233 = vadd.s32 %v229, %v231
  %v234 = vadd.s32 %v233, %v223
  %v235 = vadd.s32 %v234, %v225
  %v236 = vand.u32 %v213, 65535
  %v237 = vshrl.u32 %v213, 16
  %v238 = vand.u32 %v208, 65535
  %v239 = vshrl.u32 %v208, 16
  %v240 = vmul.u32 %v236, %v238
  %v241 = vmul.u32 %v236, %v239
  %v242 = vmul.u32 %v237, %v238
  %v243 = vmul.u32 %v237, %v239
  %v244 = vshll.u32 %v241, 16
  %v245 = vshrl.u32 %v241, 16
  %v246 = vshll.u32 %v242, 16
  %v247 = vshrl.u32 %v242, 16
  %vm248 = vc.u32 %v240, %v244
  %v249 = vsel %vm248, 1, 0
  %v250 = vadd.s32 %v240, %v244
  %v251 = vadd.s32 %v243, %v249
  %vm252 = vc.u32 %v250, %v246
  %v253 = vsel %vm252, 1, 0
  %v254 = vadd.s32 %v250, %v246
  %v255 = vadd.s32 %v251, %v253
  %v256 = vadd.s32 %v255, %v245
  %v257 = vadd.s32 %v256, %v247
  %v258 = vmul.u32 %v213, %v204
  %v259 = vadd.s32 %v235, %v254
  %vm260 = vc.u32 %v235, %v254
  %v261 = vadd.s32 %v257, 1
  %v262 = vsel %vm260, %v261, %v257
  %v263 = vadd.s32 %v258, %v262
  %v264 = vadd.s32 %v263, 536870912
  %v265 = vshrl.u32 %v264, 30
  %v266 = vshll.u32 %v265, 30
  %v267 = vsub.s32 %v263, %v266
  %vm268 = vcmp.lt.s32.totalorder %v267, 0
  %v269 = vsub.s32 0, %v267
  %v270 = vsel %vm268, %v269, %v267
  %v271 = vclz %v270
  %v272 = vsub.s32 %v271, 2
  %vm273 = vcmp.gt.s32.totalorder 0, %v272
  %v274 = vsel %vm273, 0, %v272
  %v275 = vsub.s32 32, %v274
  %v276 = vshll.u32 %v267, %v274
  %v277 = vshrl.u32 %v259, %v275
  %v278 = vor.u32 %v276, %v277
  %v279 = vsub.s32 4294967266, %v274
  %v280 = vadd.s32 %v279, 127
  %v281 = vshll.u32 %v280, 23
  %v282 = vor.u32 4788187, %v281
  %v283 = vand.u32 2147483647, %v282
  %v285 = vcvt.s32.f32 %v278
  %v286 = vmul.f32 %v285, %v283
  %v287 = vxor.u32 %v286, 2147483648
  %v288 = vsel %vm167, %v287, %v286
  %v289 = vsub.s32 4, %v265
  %v290 = vsel %vm167, %v289, %v265
  %v291 = vsel %vm166, %v8, %v288
  %v292 = vsel %vm166, 0, %v290
  %v293 = vmul.f32 %v291, %v291
  %v294 = vmul.f32 %v293, -0.001358992
  %v295 = vadd.f32 %v294, 0.041655596
  %v296 = vmul.f32 %v293, %v295
  %v297 = vadd.f32 %v296, -0.4999988
  %v298 = vmul.f32 %v293, %v297
  %v299 = vadd.f32 1.0, %v298
  %v300 = vmul.f32 %v291, %v291
  %v301 = vmul.f32 %v300, -0.00019511016
  %v302 = vadd.f32 %v301, 0.008332121
  %v303 = vmul.f32 %v300, %v302
  %v304 = vadd.f32 %v303, -0.16666654
  %v305 = vmul.f32 %v300, %v304
  %v306 = vadd.f32 %v305, 1.0
  %v307 = vmul.f32 %v306, %v291
  %vm308 = vweird.f32 %v8
  %v309 = vand.u32 %v292, 3
  %vm310 = vcmp.lt.s32.totalorder %v309, 2
  %vm311 = vcmp.eq.s32.totalorder %v309, 0
  %v312 = vxor.u32 %v307, 2147483648
  %v313 = vsel %vm311, %v299, %v312
  %vm314 = vcmp.eq.s32.totalorder %v309, 2
  %v315 = vxor.u32 %v299, 2147483648
  %v316 = vsel %vm314, %v315, %v307
  %v317 = vsel %vm310, %v313, %v316
  %v318 = vsel %vm308, nan, %v317
  %s319 = scalar_lea.vmem %s1, 8
  %320 = vst [vmem:[%s319] sm:$0xff] %v164
  %s321 = scalar_lea.vmem %s1, 16
  %322 = vst [vmem:[%s321] sm:$0xff] %v318
  %v323 = vmul.f32 %v164, 2.0
  %v324 = vmul.f32 %v323, %v318
  %v325 = vmul.f32 %v318, %v318
  %v326 = vmul.f32 %v164, %v164
  %v327 = vsub.f32 %v325, %v326
  %s328 = scalar_lea.vmem %s1, 24
  %329 = vst [vmem:[%s328] sm:$0xff] %v324
  %s330 = scalar_lea.vmem %s1, 32
  %331 = vst [vmem:[%s330] sm:$0xff] %v327
  %v332 = vmul.f32 %v324, 2.0
  %v333 = vmul.f32 %v332, %v327
  %v334 = vmul.f32 %v327, %v327
  %v335 = vmul.f32 %v324, %v324
  %v336 = vsub.f32 %v334, %v335
  %s337 = scalar_lea.vmem %s1, 40
  %338 = vst [vmem:[%s337] sm:$0xff] %v333
  %s339 = scalar_lea.vmem %s1, 48
  %340 = vst [vmem:[%s339] sm:$0xff] %v336
  %v341 = vmul.f32 %v333, 2.0
  %v342 = vmul.f32 %v341, %v336
  %v343 = vmul.f32 %v336, %v336
  %v344 = vmul.f32 %v333, %v333
  %v345 = vsub.f32 %v343, %v344
  %s346 = scalar_lea.vmem %s1, 56
  %347 = vst [vmem:[%s346] sm:$0xff] %v342
  %s348 = scalar_lea.vmem %s1, 64
  %349 = vst [vmem:[%s348] sm:$0xff] %v345
  %v350 = vmul.f32 %v342, 2.0
  %v351 = vmul.f32 %v350, %v345
  %v352 = vmul.f32 %v345, %v345
  %v353 = vmul.f32 %v342, %v342
  %v354 = vsub.f32 %v352, %v353
  %s355 = scalar_lea.vmem %s1, 72
  %356 = vst [vmem:[%s355] sm:$0xff] %v351
  %s357 = scalar_lea.vmem %s1, 80
  %358 = vst [vmem:[%s357] sm:$0xff] %v354
  %v359 = vmul.f32 %v351, 2.0
  %v360 = vmul.f32 %v359, %v354
  %v361 = vmul.f32 %v354, %v354
  %v362 = vmul.f32 %v351, %v351
  %v363 = vsub.f32 %v361, %v362
  %s364 = scalar_lea.vmem %s1, 88
  %365 = vst [vmem:[%s364] sm:$0xff] %v360
  %s366 = scalar_lea.vmem %s1, 96
  %367 = vst [vmem:[%s366] sm:$0xff] %v363
  %v368 = vmul.f32 %v8, 64.0
  %v369 = vand.u32 2147483647, %v368
  %vm370 = vcmp.le.f32.partialorder %v369, 0.7853982
  %vm371 = vcmp.lt.s32.totalorder %v368, 0
  %v372 = vand.u32 %v368, 2139095040
  %v373 = vshrl.u32 %v372, 23
  %v374 = vsub.s32 %v373, 127
  %v375 = vand.u32 2147483647, %v368
  %v376 = vand.u32 %v375, 8388607
  %v377 = vor.u32 %v376, 8388608
  %v378 = vsub.s32 0, %v377
  %v379 = vadd.s32 %v374, 1
  %vm380 = vcmp.gt.s32.totalorder %v379, 0
  %v381 = vsel %vm380, %v379, 0
  %v382 = vshrl.u32 %v381, 5
  %v383 = vand.u32 %v381, 31
  %v384 = vsub.s32 32, %v383
  %v385 = vshrl.u32 683565275, %v384
  %v386 = vshll.u32 683565275, %v383
  %v387 = vshrl.u32 2475754826, %v384
  %v388 = vor.u32 %v386, %v387
  %v389 = vshll.u32 2475754826, %v383
  %v390 = vshrl.u32 2131351028, %v384
  %v391 = vor.u32 %v389, %v390
  %v392 = vshll.u32 2131351028, %v383
  %v393 = vshrl.u32 2102212464, %v384
  %v394 = vor.u32 %v392, %v393
  %v395 = vshll.u32 2102212464, %v383
  %v396 = vshrl.u32 920167782, %v384
  %v397 = vor.u32 %v395, %v396
  %v398 = vshll.u32 920167782, %v383
  %v399 = vshrl.u32 1326507024, %v384
  %v400 = vor.u32 %v398, %v399
  %vm401 = vcmp.lt.s32.totalorder %v382, 1
  %vm402 = vcmp.lt.s32.totalorder %v382, 2
  %vm403 = vcmp.lt.s32.totalorder %v382, 3
  %vm404 = vcmp.lt.s32.totalorder %v382, 4
  %v405 = vsel %vm401, %v385, %v388
  %v406 = vsel %vm404, %v394, 2102212464
  %v407 = vsel %vm403, %v391, %v406
  %v408 = vsel %vm402, %v405, %v407
  %v409 = vsel %vm401, %v388, %v391
  %v410 = vsel %vm404, %v397, 920167782
  %v411 = vsel %vm403, %v394, %v410
  %v412 = vsel %vm402, %v409, %v411
  %v413 = vsel %vm401, %v391, %v394
  %v414 = vsel %vm404, %v400, 1326507024
  %v415 = vsel %vm403, %v397, %v414
  %v416 = vsel %vm402, %v413, %v415
  %v417 = vshll.u32 %v377, 8
  %v418 = vand.u32 %v417, 65535
  %v419 = vshrl.u32 %v417, 16
  %v420 = vand.u32 %v416, 65535
  %v421 = vshrl.u32 %v416, 16
  %v422 = vmul.u32 %v418, %v420
  %v423 = vmul.u32 %v418, %v421
  %v424 = vmul.u32 %v419, %v420
  %v425 = vmul.u32 %v419, %v421
  %v426 = vshll.u32 %v423, 16
  %v427 = vshrl.u32 %v423, 16
  %v428 = vshll.u32 %v424, 16
  %v429 = vshrl.u32 %v424, 16
  %vm430 = vc.u32 %v422, %v426
  %v431 = vsel %vm430, 1, 0
  %v432 = vadd.s32 %v422, %v426
  %v433 = vadd.s32 %v425, %v431
  %vm434 = vc.u32 %v432, %v428
  %v435 = vsel %vm434, 1, 0
  %v436 = vadd.s32 %v432, %v428
  %v437 = vadd.s32 %v433, %v435
  %v438 = vadd.s32 %v437, %v427
  %v439 = vadd.s32 %v438, %v429
  %v440 = vand.u32 %v417, 65535
  %v441 = vshrl.u32 %v417, 16
  %v442 = vand.u32 %v412, 65535
  %v443 = vshrl.u32 %v412, 16
  %v444 = vmul.u32 %v440, %v442
  %v445 = vmul.u32 %v440, %v443
  %v446 = vmul.u32 %v441, %v442
  %v447 = vmul.u32 %v441, %v443
  %v448 = vshll.u32 %v445, 16
  %v449 = vshrl.u32 %v445, 16
  %v450 = vshll.u32 %v446, 16
  %v451 = vshrl.u32 %v446, 16
  %vm452 = vc.u32 %v444, %v448
  %v453 = vsel %vm452, 1, 0
  %v454 = vadd.s32 %v444, %v448
  %v455 = vadd.s32 %v447, %v453
  %vm456 = vc.u32 %v454, %v450
  %v457 = vsel %vm456, 1, 0
  %v458 = vadd.s32 %v454, %v450
  %v459 = vadd.s32 %v455, %v457
  %v460 = vadd.s32 %v459, %v449
  %v461 = vadd.s32 %v460, %v451
  %v462 = vmul.u32 %v417, %v408
  %v463 = vadd.s32 %v439, %v458
  %vm464 = vc.u32 %v439, %v458
  %v465 = vadd.s32 %v461, 1
  %v466 = vsel %vm464, %v465, %v461
  %v467 = vadd.s32 %v462, %v466
  %v468 = vadd.s32 %v467, 536870912
  %v469 = vshrl.u32 %v468, 30
  %v470 = vshll.u32 %v469, 30
  %v471 = vsub.s32 %v467, %v470
  %vm472 = vcmp.lt.s32.totalorder %v471, 0
  %v473 = vsub.s32 0, %v471
  %v474 = vsel %vm472, %v473, %v471
  %v475 = vclz %v474
  %v476 = vsub.s32 %v475, 2
  %vm477 = vcmp.gt.s32.totalorder 0, %v476
  %v478 = vsel %vm477, 0, %v476
  %v479 = vsub.s32 32, %v478
  %v480 = vshll.u32 %v471, %v478
  %v481 = vshrl.u32 %v463, %v479
  %v482 = vor.u32 %v480, %v481
  %v483 = vsub.s32 4294967266, %v478
  %v484 = vadd.s32 %v483, 127
  %v485 = vshll.u32 %v484, 23
  %v486 = vor.u32 4788187, %v485
  %v487 = vand.u32 2147483647, %v486
  %v489 = vcvt.s32.f32 %v482
  %v490 = vmul.f32 %v489, %v487
  %v491 = vxor.u32 %v490, 2147483648
  %v492 = vsel %vm371, %v491, %v490
  %v493 = vsub.s32 4, %v469
  %v494 = vsel %vm371, %v493, %v469
  %v495 = vsel %vm370, %v368, %v492
  %v496 = vsel %vm370, 0, %v494
  %v497 = vmul.f32 %v495, %v495
  %v498 = vmul.f32 %v497, -0.001358992
  %v499 = vadd.f32 %v498, 0.041655596
  %v500 = vmul.f32 %v497, %v499
  %v501 = vadd.f32 %v500, -0.4999988
  %v502 = vmul.f32 %v497, %v501
  %v503 = vadd.f32 1.0, %v502
  %v504 = vmul.f32 %v495, %v495
  %v505 = vmul.f32 %v504, -0.00019511016
  %v506 = vadd.f32 %v505, 0.008332121
  %v507 = vmul.f32 %v504, %v506
  %v508 = vadd.f32 %v507, -0.16666654
  %v509 = vmul.f32 %v504, %v508
  %v510 = vadd.f32 %v509, 1.0
  %v511 = vmul.f32 %v510, %v495
  %vm512 = vweird.f32 %v368
  %v513 = vadd.s32 %v496, 3
  %v514 = vand.u32 %v513, 3
  %vm515 = vcmp.lt.s32.totalorder %v514, 2
  %vm516 = vcmp.eq.s32.totalorder %v514, 0
  %v517 = vxor.u32 %v511, 2147483648
  %v518 = vsel %vm516, %v503, %v517
  %vm519 = vcmp.eq.s32.totalorder %v514, 2
  %v520 = vxor.u32 %v503, 2147483648
  %v521 = vsel %vm519, %v520, %v511
  %v522 = vsel %vm515, %v518, %v521
  %v523 = vsel %vm512, nan, %v522
  %v524 = vand.u32 2147483647, %v368
  %vm525 = vcmp.le.f32.partialorder %v524, 0.7853982
  %vm526 = vcmp.lt.s32.totalorder %v368, 0
  %v527 = vand.u32 %v368, 2139095040
  %v528 = vshrl.u32 %v527, 23
  %v529 = vsub.s32 %v528, 127
  %v530 = vand.u32 2147483647, %v368
  %v531 = vand.u32 %v530, 8388607
  %v532 = vor.u32 %v531, 8388608
  %v533 = vsub.s32 0, %v532
  %v534 = vadd.s32 %v529, 1
  %vm535 = vcmp.gt.s32.totalorder %v534, 0
  %v536 = vsel %vm535, %v534, 0
  %v537 = vshrl.u32 %v536, 5
  %v538 = vand.u32 %v536, 31
  %v539 = vsub.s32 32, %v538
  %v540 = vshrl.u32 683565275, %v539
  %v541 = vshll.u32 683565275, %v538
  %v542 = vshrl.u32 2475754826, %v539
  %v543 = vor.u32 %v541, %v542
  %v544 = vshll.u32 2475754826, %v538
  %v545 = vshrl.u32 2131351028, %v539
  %v546 = vor.u32 %v544, %v545
  %v547 = vshll.u32 2131351028, %v538
  %v548 = vshrl.u32 2102212464, %v539
  %v549 = vor.u32 %v547, %v548
  %v550 = vshll.u32 2102212464, %v538
  %v551 = vshrl.u32 920167782, %v539
  %v552 = vor.u32 %v550, %v551
  %v553 = vshll.u32 920167782, %v538
  %v554 = vshrl.u32 1326507024, %v539
  %v555 = vor.u32 %v553, %v554
  %vm556 = vcmp.lt.s32.totalorder %v537, 1
  %vm557 = vcmp.lt.s32.totalorder %v537, 2
  %vm558 = vcmp.lt.s32.totalorder %v537, 3
  %vm559 = vcmp.lt.s32.totalorder %v537, 4
  %v560 = vsel %vm556, %v540, %v543
  %v561 = vsel %vm559, %v549, 2102212464
  %v562 = vsel %vm558, %v546, %v561
  %v563 = vsel %vm557, %v560, %v562
  %v564 = vsel %vm556, %v543, %v546
  %v565 = vsel %vm559, %v552, 920167782
  %v566 = vsel %vm558, %v549, %v565
  %v567 = vsel %vm557, %v564, %v566
  %v568 = vsel %vm556, %v546, %v549
  %v569 = vsel %vm559, %v555, 1326507024
  %v570 = vsel %vm558, %v552, %v569
  %v571 = vsel %vm557, %v568, %v570
  %v572 = vshll.u32 %v532, 8
  %v573 = vand.u32 %v572, 65535
  %v574 = vshrl.u32 %v572, 16
  %v575 = vand.u32 %v571, 65535
  %v576 = vshrl.u32 %v571, 16
  %v577 = vmul.u32 %v573, %v575
  %v578 = vmul.u32 %v573, %v576
  %v579 = vmul.u32 %v574, %v575
  %v580 = vmul.u32 %v574, %v576
  %v581 = vshll.u32 %v578, 16
  %v582 = vshrl.u32 %v578, 16
  %v583 = vshll.u32 %v579, 16
  %v584 = vshrl.u32 %v579, 16
  %vm585 = vc.u32 %v577, %v581
  %v586 = vsel %vm585, 1, 0
  %v587 = vadd.s32 %v577, %v581
  %v588 = vadd.s32 %v580, %v586
  %vm589 = vc.u32 %v587, %v583
  %v590 = vsel %vm589, 1, 0
  %v591 = vadd.s32 %v587, %v583
  %v592 = vadd.s32 %v588, %v590
  %v593 = vadd.s32 %v592, %v582
  %v594 = vadd.s32 %v593, %v584
  %v595 = vand.u32 %v572, 65535
  %v596 = vshrl.u32 %v572, 16
  %v597 = vand.u32 %v567, 65535
  %v598 = vshrl.u32 %v567, 16
  %v599 = vmul.u32 %v595, %v597
  %v600 = vmul.u32 %v595, %v598
  %v601 = vmul.u32 %v596, %v597
  %v602 = vmul.u32 %v596, %v598
  %v603 = vshll.u32 %v600, 16
  %v604 = vshrl.u32 %v600, 16
  %v605 = vshll.u32 %v601, 16
  %v606 = vshrl.u32 %v601, 16
  %vm607 = vc.u32 %v599, %v603
  %v608 = vsel %vm607, 1, 0
  %v609 = vadd.s32 %v599, %v603
  %v610 = vadd.s32 %v602, %v608
  %vm611 = vc.u32 %v609, %v605
  %v612 = vsel %vm611, 1, 0
  %v613 = vadd.s32 %v609, %v605
  %v614 = vadd.s32 %v610, %v612
  %v615 = vadd.s32 %v614, %v604
  %v616 = vadd.s32 %v615, %v606
  %v617 = vmul.u32 %v572, %v563
  %v618 = vadd.s32 %v594, %v613
  %vm619 = vc.u32 %v594, %v613
  %v620 = vadd.s32 %v616, 1
  %v621 = vsel %vm619, %v620, %v616
  %v622 = vadd.s32 %v617, %v621
  %v623 = vadd.s32 %v622, 536870912
  %v624 = vshrl.u32 %v623, 30
  %v625 = vshll.u32 %v624, 30
  %v626 = vsub.s32 %v622, %v625
  %vm627 = vcmp.lt.s32.totalorder %v626, 0
  %v628 = vsub.s32 0, %v626
  %v629 = vsel %vm627, %v628, %v626
  %v630 = vclz %v629
  %v631 = vsub.s32 %v630, 2
  %vm632 = vcmp.gt.s32.totalorder 0, %v631
  %v633 = vsel %vm632, 0, %v631
  %v634 = vsub.s32 32, %v633
  %v635 = vshll.u32 %v626, %v633
  %v636 = vshrl.u32 %v618, %v634
  %v637 = vor.u32 %v635, %v636
  %v638 = vsub.s32 4294967266, %v633
  %v639 = vadd.s32 %v638, 127
  %v640 = vshll.u32 %v639, 23
  %v641 = vor.u32 4788187, %v640
  %v642 = vand.u32 2147483647, %v641
  %v644 = vcvt.s32.f32 %v637
  %v645 = vmul.f32 %v644, %v642
  %v646 = vxor.u32 %v645, 2147483648
  %v647 = vsel %vm526, %v646, %v645
  %v648 = vsub.s32 4, %v624
  %v649 = vsel %vm526, %v648, %v624
  %v650 = vsel %vm525, %v368, %v647
  %v651 = vsel %vm525, 0, %v649
  %v652 = vmul.f32 %v650, %v650
  %v653 = vmul.f32 %v652, -0.001358992
  %v654 = vadd.f32 %v653, 0.041655596
  %v655 = vmul.f32 %v652, %v654
  %v656 = vadd.f32 %v655, -0.4999988
  %v657 = vmul.f32 %v652, %v656
  %v658 = vadd.f32 1.0, %v657
  %v659 = vmul.f32 %v650, %v650
  %v660 = vmul.f32 %v659, -0.00019511016
  %v661 = vadd.f32 %v660, 0.008332121
  %v662 = vmul.f32 %v659, %v661
  %v663 = vadd.f32 %v662, -0.16666654
  %v664 = vmul.f32 %v659, %v663
  %v665 = vadd.f32 %v664, 1.0
  %v666 = vmul.f32 %v665, %v650
  %vm667 = vweird.f32 %v368
  %v668 = vand.u32 %v651, 3
  %vm669 = vcmp.lt.s32.totalorder %v668, 2
  %vm670 = vcmp.eq.s32.totalorder %v668, 0
  %v671 = vxor.u32 %v666, 2147483648
  %v672 = vsel %vm670, %v658, %v671
  %vm673 = vcmp.eq.s32.totalorder %v668, 2
  %v674 = vxor.u32 %v658, 2147483648
  %v675 = vsel %vm673, %v674, %v666
  %v676 = vsel %vm669, %v672, %v675
  %v677 = vsel %vm667, nan, %v676
  %s678 = scalar_lea.vmem %s1, 104
  %679 = vst [vmem:[%s678] sm:$0xff] %v523
  %s680 = scalar_lea.vmem %s1, 112
  %681 = vst [vmem:[%s680] sm:$0xff] %v677
  %v682 = vmul.f32 %v523, 2.0
  %v683 = vmul.f32 %v682, %v677
  %v684 = vmul.f32 %v677, %v677
  %v685 = vmul.f32 %v523, %v523
  %v686 = vsub.f32 %v684, %v685
  %s687 = scalar_lea.vmem %s1, 120
  %688 = vst [vmem:[%s687] sm:$0xff] %v683
  %s689 = scalar_lea.vmem %s1, 128
  %690 = vst [vmem:[%s689] sm:$0xff] %v686
  %v691 = vmul.f32 %v683, 2.0
  %v692 = vmul.f32 %v691, %v686
  %v693 = vmul.f32 %v686, %v686
  %v694 = vmul.f32 %v683, %v683
  %v695 = vsub.f32 %v693, %v694
  %s696 = scalar_lea.vmem %s1, 136
  %697 = vst [vmem:[%s696] sm:$0xff] %v692
  %s698 = scalar_lea.vmem %s1, 144
  %699 = vst [vmem:[%s698] sm:$0xff] %v695
  %v700 = vmul.f32 %v692, 2.0
  %v701 = vmul.f32 %v700, %v695
  %v702 = vmul.f32 %v695, %v695
  %v703 = vmul.f32 %v692, %v692
  %v704 = vsub.f32 %v702, %v703
  %s705 = scalar_lea.vmem %s1, 152
  %706 = vst [vmem:[%s705] sm:$0xff] %v701
  %s707 = scalar_lea.vmem %s1, 160
  %708 = vst [vmem:[%s707] sm:$0xff] %v704
  // Predicated region
  $region6: #{embedding.1} parent=0 // pred_check
    _
  $region7: #{embedding.1} parent=0 // pred_check_branch
    %710 = sbr.rel (0) target = $region9
  $region8: #{embedding.1} parent=0 // pred_region
    _
  $region9: #{embedding.1} parent=0 // pred_fallthru
    _
  // Predicated region
  $region10: #{embedding.1} parent=0 // pred_check
    _
  $region11: #{embedding.1} parent=0 // pred_check_branch
    %712 = sbr.rel (0) target = $region13
  $region12: #{embedding.1} parent=0 // pred_region
    _
  $region13: #{embedding.1} parent=0 // pred_fallthru
    _

</llo_original>
